<compile_context>
chip_gen: v7x
topology: tpu7x:2x2x1
jax: 0.10.0
libtpu: 0.0.40
codegen_flags: <defaults>
</compile_context>

<pallas_src>
import jax
import jax.numpy as jnp
from jax.experimental import pallas as pl
from jax.experimental.pallas import tpu as pltpu


def _round_up(x, m):
    return ((x + m - 1) // m) * m


def _softmax_xent_partial(logits_f32, labels, tile_idx, tb, B, C, c_pad, b_pad):
    """Per-tile cross-entropy partial sum (f32 scalar) from in-vreg f32 logits."""
    col = jax.lax.broadcasted_iota(jnp.int32, logits_f32.shape, 1)
    if c_pad != C:
        # Padded class lanes must not affect max / logsumexp.
        masked = jnp.where(col < C, logits_f32, -jnp.inf)
    else:
        masked = logits_f32
    m = jnp.max(masked, axis=-1, keepdims=True)                               # (tb, 1)
    lse = jnp.log(jnp.sum(jnp.exp(masked - m), axis=-1, keepdims=True)) + m   # (tb, 1)
    # Label one-hot pick uses the raw logits: labels are always < C, so padded lanes never hit.
    picked = jnp.sum(jnp.where(col == labels, logits_f32, 0.0), axis=-1, keepdims=True)
    per_example = lse - picked                                                # (tb, 1)
    if b_pad != B:
        # Padded batch rows must not contribute to the loss.
        row = jax.lax.broadcasted_iota(jnp.int32, per_example.shape, 0) + tile_idx * tb
        per_example = jnp.where(row < B, per_example, 0.0)
    return jnp.sum(per_example)


def _make_fused_kernel(return_logits, B, C, c_pad, b_pad, tb, logits_dtype):
    def kernel(x_ref, w_ref, b_ref, y_ref, *out_refs):
        i = pl.program_id(0)
        # Single fused Linear on the MXU, f32 accumulation (operands may be bf16 from the wrapper).
        logits = jnp.dot(x_ref[...], w_ref[...], preferred_element_type=jnp.float32)
        logits = logits + b_ref[...]                                          # (tb, c_pad) f32
        if return_logits:
            logits_ref, loss_ref = out_refs
            logits_ref[...] = logits.astype(logits_dtype)                     # full-lane store
        else:
            (loss_ref,) = out_refs
        loss_ref[0, 0] = _softmax_xent_partial(logits, y_ref[...], i, tb, B, C, c_pad, b_pad)
    return kernel


def _make_two_layer_kernel(return_logits, B, C, c_pad, b_pad, tb, logits_dtype):
    def kernel(x_ref, w1_ref, b1_ref, w2_ref, b2_ref, y_ref, *out_refs):
        i = pl.program_id(0)
        h = jnp.dot(x_ref[...], w1_ref[...], preferred_element_type=jnp.float32) + b1_ref[...]
        logits = jnp.dot(h.astype(w2_ref.dtype), w2_ref[...],
                         preferred_element_type=jnp.float32) + b2_ref[...]
        if return_logits:
            logits_ref, loss_ref = out_refs
            logits_ref[...] = logits.astype(logits_dtype)
        else:
            (loss_ref,) = out_refs
        loss_ref[0, 0] = _softmax_xent_partial(logits, y_ref[...], i, tb, B, C, c_pad, b_pad)
    return kernel


def ffnn_forward(x, w1, b1, w2, b2, y, *, block_b=512, use_bf16_matmul=False,
                 return_logits=True, return_padded_logits=False,
                 logits_dtype=jnp.float32, fuse=None):
    """x: (B, D_in) f32; w1: (D_in, H); b1: (1, H); w2: (H, C); b2: (1, C); y: (B, 1) int32.

    Weights are pre-transposed ([in_dim, out_dim]) so the kernel computes y = x @ W + b.
    Returns (logits, mean CE loss) or just the loss if return_logits=False.
    With return_padded_logits=True, logits are returned as the padded (b_pad, c_pad) slab
    (no extra HBM pass); padded lanes/rows are zero-weight garbage the caller must ignore.
    """
    B, d_in = x.shape
    H = w1.shape[1]
    C = w2.shape[1]

    c_pad = _round_up(C, 128)                       # lane-dense class dim
    mm_dtype = jnp.bfloat16 if use_bf16_matmul else jnp.float32
    mm_bytes = jnp.dtype(mm_dtype).itemsize

    # (7) Gate the algebraic fusion on shapes (valid only because Dropout is identity in eval
    # mode and there is no nonlinearity between the Linears).
    if fuse is None:
        fuse = (d_in * C <= H * (d_in + C)) and (d_in * c_pad * mm_bytes <= 24 * 1024 * 1024)

    # (1) Batch tile: multiple of 8 sublanes, default 512, clamped to the (padded) batch.
    tb = min(_round_up(block_b, 8), _round_up(B, 8))
    b_pad = _round_up(B, tb)
    num_tiles = b_pad // tb

    # (3) Cast matmul operands BEFORE the DMA (wrapper side) when using bf16.
    x_p = jnp.pad(x, ((0, b_pad - B), (0, 0))).astype(mm_dtype)
    y_p = jnp.pad(y, ((0, b_pad - B), (0, 0)))

    # (2) Resident (grid-constant) blocks: single-buffered.
    def resident(shape):
        return pl.BlockSpec(shape, lambda i: (0,) * len(shape), pipeline_mode=pl.Buffered(1))

    if fuse:
        # NOTE: recomputed per jit call; precompute outside jit if weights are static.
        w_fused = jnp.dot(w1, w2, precision=jax.lax.Precision.HIGHEST)        # (d_in, C)
        b_fused = jnp.dot(b1, w2, precision=jax.lax.Precision.HIGHEST) + b2   # (1, C)
        w_p = jnp.pad(w_fused, ((0, 0), (0, c_pad - C))).astype(mm_dtype)
        b_p = jnp.pad(b_fused, ((0, 0), (0, c_pad - C)))                      # bias stays f32
        inputs = (x_p, w_p, b_p, y_p)
        in_specs = [
            pl.BlockSpec((tb, d_in), lambda i: (i, 0)),     # x tile (pipelined)
            resident((d_in, c_pad)),                        # fused weight
            resident((1, c_pad)),                           # fused bias
            pl.BlockSpec((tb, 1), lambda i: (i, 0)),        # labels tile
        ]
        resident_bytes = d_in * c_pad * mm_bytes + c_pad * 4
        kernel = _make_fused_kernel(return_logits, B, C, c_pad, b_pad, tb, logits_dtype)
    else:
        h_pad = _round_up(H, 128)
        w1_p = jnp.pad(w1, ((0, 0), (0, h_pad - H))).astype(mm_dtype)
        b1_p = jnp.pad(b1, ((0, 0), (0, h_pad - H)))
        w2_p = jnp.pad(w2, ((0, h_pad - H), (0, c_pad - C))).astype(mm_dtype)
        b2_p = jnp.pad(b2, ((0, 0), (0, c_pad - C)))
        inputs = (x_p, w1_p, b1_p, w2_p, b2_p, y_p)
        in_specs = [
            pl.BlockSpec((tb, d_in), lambda i: (i, 0)),
            resident((d_in, h_pad)),
            resident((1, h_pad)),
            resident((h_pad, c_pad)),
            resident((1, c_pad)),
            pl.BlockSpec((tb, 1), lambda i: (i, 0)),
        ]
        resident_bytes = (d_in * h_pad + h_pad * c_pad) * mm_bytes + (h_pad + c_pad) * 4
        kernel = _make_two_layer_kernel(return_logits, B, C, c_pad, b_pad, tb, logits_dtype)

    # Loss partials go out on the scalar path (SMEM); reduced / divided by B in the wrapper.
    loss_spec = pl.BlockSpec((1, 1), lambda i: (i, 0), memory_space=pltpu.MemorySpace.SMEM)
    loss_shape = jax.ShapeDtypeStruct((num_tiles, 1), jnp.float32)
    if return_logits:
        out_shape = (jax.ShapeDtypeStruct((b_pad, c_pad), logits_dtype), loss_shape)
        out_specs = (pl.BlockSpec((tb, c_pad), lambda i: (i, 0)), loss_spec)
    else:
        out_shape = loss_shape
        out_specs = loss_spec

    # (2) Explicit VMEM budget: resident weights (single-buffered) + double-buffered streams
    # + double-buffered logits output + headroom for in-flight vregs.
    logits_bytes = jnp.dtype(logits_dtype).itemsize
    stream_bytes = 2 * (tb * d_in * mm_bytes + tb * 4)
    out_bytes = (2 * tb * c_pad * logits_bytes) if return_logits else 0
    headroom = 4 * tb * c_pad * 4
    vmem_limit = int(min(max(1.25 * (resident_bytes + stream_bytes + out_bytes + headroom),
                             32 * 1024 * 1024),
                         100 * 1024 * 1024))

    result = pl.pallas_call(
        kernel,
        out_shape=out_shape,
        grid_spec=pltpu.PrefetchScalarGridSpec(
            num_scalar_prefetch=0,
            grid=(num_tiles,),
            in_specs=in_specs,
            out_specs=out_specs,
        ),
        compiler_params=pltpu.CompilerParams(
            # Batch tiles are independent -> both TensorCores on v7x; harmless on v5e/v6e.
            dimension_semantics=("parallel",),
            vmem_limit_bytes=vmem_limit,
        ),
    )(*inputs)

    if return_logits:
        logits_p, loss_parts = result
    else:
        loss_parts = result

    loss = jnp.sum(loss_parts) / jnp.float32(B)
    if not return_logits:
        return loss
    if return_padded_logits or (b_pad == B and c_pad == C):
        return logits_p, loss            # no extra HBM pass
    return logits_p[:B, :C], loss        # only pays the slice when padding exists


def init_linear(key, in_dim, out_dim):
    # torch.nn.Linear default: U(-1/sqrt(in_dim), 1/sqrt(in_dim)) for both W and b.
    kw, kb = jax.random.split(key)
    bound = 1.0 / jnp.sqrt(jnp.float32(in_dim))
    w = jax.random.uniform(kw, (in_dim, out_dim), jnp.float32, -bound, bound)  # pre-transposed
    b = jax.random.uniform(kb, (1, out_dim), jnp.float32, -bound, bound)
    return w, b


if __name__ == "__main__":
    # Small shapes consistent with the module: nlayers=2 FcTube.
    batch, input_dim, hidden_dim, output_dim = 8, 32, 32, 8

    key = jax.random.PRNGKey(0)
    kx, ky, k1, k2 = jax.random.split(key, 4)

    x = jax.random.normal(kx, (batch, input_dim), jnp.float32)
    y = jax.random.randint(ky, (batch, 1), 0, output_dim, jnp.int32)

    w1, b1 = init_linear(k1, input_dim, hidden_dim)
    w2, b2 = init_linear(k2, hidden_dim, output_dim)

    ffnn = jax.jit(ffnn_forward,
                   static_argnames=("block_b", "use_bf16_matmul", "return_logits",
                                    "return_padded_logits", "logits_dtype", "fuse"))

    # Reference in plain JAX (same semantics as the torch forward in eval mode).
    ref_logits = (x @ w1 + b1) @ w2 + b2
    ref_lse = jax.scipy.special.logsumexp(ref_logits, axis=-1)
    ref_loss = jnp.mean(ref_lse - jnp.take_along_axis(ref_logits, y, axis=1)[:, 0])

    # 1) Default path (auto fusion -> fused single matmul here).
    logits, loss = ffnn(x, w1, b1, w2, b2, y)
    jax.block_until_ready((logits, loss))
    # atol 1e-4: fused (x @ (w1 @ w2)) differs from ((x @ w1) @ w2) only by f32 reassociation.
    assert jnp.allclose(logits, ref_logits, atol=1e-4), float(jnp.max(jnp.abs(logits - ref_logits)))
    assert jnp.allclose(loss, ref_loss, atol=1e-4), float(jnp.abs(loss - ref_loss))

    # 2) Forced two-matmul (non-fused) path.
    logits2, loss2 = ffnn(x, w1, b1, w2, b2, y, fuse=False)
    jax.block_until_ready((logits2, loss2))
    assert jnp.allclose(logits2, ref_logits, atol=1e-4), float(jnp.max(jnp.abs(logits2 - ref_logits)))
    assert jnp.allclose(loss2, ref_loss, atol=1e-4), float(jnp.abs(loss2 - ref_loss))

    # 3) Loss-only mode (skips the dominant logits HBM write).
    loss3 = ffnn(x, w1, b1, w2, b2, y, return_logits=False)
    jax.block_until_ready(loss3)
    assert jnp.allclose(loss3, ref_loss, atol=1e-4), float(jnp.abs(loss3 - ref_loss))

    print("KERNEL_OK")
</pallas_src>

<mosaic_0001>
module attributes {stable_mosaic.version = 11 : i64} {
  func.func @kernel(%arg0: i32, %arg1: memref<8x32xf32, #tpu.memory_space<vmem>>, %arg2: memref<32x128xf32, #tpu.memory_space<vmem>>, %arg3: memref<1x128xf32, #tpu.memory_space<vmem>>, %arg4: memref<8x1xi32, #tpu.memory_space<vmem>>, %arg5: memref<8x128xf32, #tpu.memory_space<vmem>>, %arg6: memref<1x1xf32, #tpu.memory_space<smem>>) attributes {dimension_semantics = [#tpu.dimension_semantics<parallel>], iteration_bounds = array<i64: 1>, scalar_prefetch = 0 : i64, scratch_operands = 0 : i64, tpu.core_type = #tpu.core_type<tc>, window_params = [{transform_indices = @transform_0, window_bounds = array<i64: 8, 32>}, {pipeline_mode = #tpu.pipeline_mode<synchronous>, transform_indices = @transform_1, window_bounds = array<i64: 32, 128>}, {pipeline_mode = #tpu.pipeline_mode<synchronous>, transform_indices = @transform_2, window_bounds = array<i64: 1, 128>}, {transform_indices = @transform_3, window_bounds = array<i64: 8, 1>}, {transform_indices = @transform_4, window_bounds = array<i64: 8, 128>}, {transform_indices = @transform_5, window_bounds = array<i64: 1, 1>}]} {
    %c0 = arith.constant 0 : index
    %c0_0 = arith.constant 0 : index
    %0 = vector.load %arg1[%c0, %c0_0] : memref<8x32xf32, #tpu.memory_space<vmem>>, vector<8x32xf32>
    %c0_1 = arith.constant 0 : index
    %c0_2 = arith.constant 0 : index
    %1 = vector.load %arg2[%c0_1, %c0_2] : memref<32x128xf32, #tpu.memory_space<vmem>>, vector<32x128xf32>
    %cst = arith.constant dense<0.000000e+00> : vector<8x128xf32>
    %2 = tpu.matmul %0, %1, %cst {dimension_numbers = #tpu.dot_dimension_numbers<[1], [0], [0], [1], [0, 0, 1, 1], [], []>} : vector<8x32xf32>, vector<32x128xf32>, vector<8x128xf32> -> vector<8x128xf32>
    %c0_3 = arith.constant 0 : index
    %c0_4 = arith.constant 0 : index
    %3 = vector.load %arg3[%c0_3, %c0_4] : memref<1x128xf32, #tpu.memory_space<vmem>>, vector<1x128xf32>
    %4 = vector.broadcast %3 : vector<1x128xf32> to vector<8x128xf32>
    %5 = arith.addf %2, %4 : vector<8x128xf32>
    %c0_5 = arith.constant 0 : index
    %c0_6 = arith.constant 0 : index
    %6 = vector.load %arg5[%c0_5, %c0_6] : memref<8x128xf32, #tpu.memory_space<vmem>>, vector<8x128xf32>
    tpu.vector_store %arg5[%c0_5, %c0_6], %5 {strides = array<i32>} : memref<8x128xf32, #tpu.memory_space<vmem>>, vector<8x128xf32>,
    %c0_7 = arith.constant 0 : index
    %c0_8 = arith.constant 0 : index
    %7 = vector.load %arg4[%c0_7, %c0_8] : memref<8x1xi32, #tpu.memory_space<vmem>>, vector<8x1xi32>
    %8 = tpu.iota {dimensions = array<i32: 1>} : vector<8x128xi32>
    %c8_i32 = arith.constant 8 : i32
    %9 = vector.broadcast %c8_i32 : i32 to vector<8x128xi32>
    %10 = arith.cmpi slt, %8, %9 : vector<8x128xi32>
    %cst_9 = arith.constant 0xFF800000 : f32
    %11 = vector.broadcast %cst_9 : f32 to vector<8x128xf32>
    %12 = arith.select %10, %5, %11 : vector<8x128xi1>, vector<8x128xf32>
    %cst_10 = arith.constant dense<0xFF800000> : vector<8xf32>
    %13 = vector.multi_reduction <maximumf>, %12, %cst_10 [1] : vector<8x128xf32> to vector<8xf32>
    %14 = vector.shape_cast %13 : vector<8xf32> to vector<8x1xf32>
    %15 = vector.broadcast %14 : vector<8x1xf32> to vector<8x128xf32>
    %16 = arith.subf %12, %15 : vector<8x128xf32>
    %17 = math.exp %16 : vector<8x128xf32>
    %cst_11 = arith.constant dense<0.000000e+00> : vector<8xf32>
    %18 = vector.multi_reduction <add>, %17, %cst_11 [1] : vector<8x128xf32> to vector<8xf32>
    %19 = vector.shape_cast %18 : vector<8xf32> to vector<8x1xf32>
    %20 = math.log %19 : vector<8x1xf32>
    %21 = arith.addf %20, %14 : vector<8x1xf32>
    %22 = vector.broadcast %7 : vector<8x1xi32> to vector<8x128xi32>
    %23 = arith.cmpi eq, %8, %22 : vector<8x128xi32>
    %cst_12 = arith.constant 0.000000e+00 : f32
    %24 = vector.broadcast %cst_12 : f32 to vector<8x128xf32>
    %25 = arith.select %23, %5, %24 : vector<8x128xi1>, vector<8x128xf32>
    %cst_13 = arith.constant dense<0.000000e+00> : vector<8xf32>
    %26 = vector.multi_reduction <add>, %25, %cst_13 [1] : vector<8x128xf32> to vector<8xf32>
    %27 = vector.shape_cast %26 : vector<8xf32> to vector<8x1xf32>
    %28 = arith.subf %21, %27 : vector<8x1xf32>
    %29 = vector.shape_cast %28 : vector<8x1xf32> to vector<1x8x1xf32>
    %cst_14 = arith.constant dense<0.000000e+00> : vector<1xf32>
    %30 = vector.multi_reduction <add>, %29, %cst_14 [1, 2] : vector<1x8x1xf32> to vector<1xf32>
    %31 = vector.shape_cast %30 : vector<1xf32> to vector<1x1x1xf32>
    %32 = vector.extract %31[0, 0, 0] : f32 from vector<1x1x1xf32>
    %c0_15 = arith.constant 0 : index
    %c0_16 = arith.constant 0 : index
    %33 = memref.load %arg6[%c0_15, %c0_16] : memref<1x1xf32, #tpu.memory_space<smem>>
    memref.store %32, %arg6[%c0_15, %c0_16] : memref<1x1xf32, #tpu.memory_space<smem>>
    return
  }
  func.func @transform_0(%arg0: i32) -> (i32, i32) {
    %c0_i32 = arith.constant 0 : i32
    %c0_i32_0 = arith.constant 0 : i32
    return %arg0, %c0_i32 : i32, i32
  }
  func.func @transform_1(%arg0: i32) -> (i32, i32) {
    %c0_i32 = arith.constant 0 : i32
    %c0_i32_0 = arith.constant 0 : i32
    %c0_i32_1 = arith.constant 0 : i32
    return %c0_i32, %c0_i32_0 : i32, i32
  }
  func.func @transform_2(%arg0: i32) -> (i32, i32) {
    %c0_i32 = arith.constant 0 : i32
    %c0_i32_0 = arith.constant 0 : i32
    %c0_i32_1 = arith.constant 0 : i32
    return %c0_i32, %c0_i32_0 : i32, i32
  }
  func.func @transform_3(%arg0: i32) -> (i32, i32) {
    %c0_i32 = arith.constant 0 : i32
    %c0_i32_0 = arith.constant 0 : i32
    return %arg0, %c0_i32 : i32, i32
  }
  func.func @transform_4(%arg0: i32) -> (i32, i32) {
    %c0_i32 = arith.constant 0 : i32
    %c0_i32_0 = arith.constant 0 : i32
    return %arg0, %c0_i32 : i32, i32
  }
  func.func @transform_5(%arg0: i32) -> (i32, i32) {
    %c0_i32 = arith.constant 0 : i32
    %c0_i32_0 = arith.constant 0 : i32
    return %arg0, %c0_i32 : i32, i32
  }
}

</mosaic_0001>

<llo_original>
// kernel: ffnn_forward.1
$region0: #{ffnn_forward.1}
  #allocation0 [shape = 'u32[]', space=smem, size = 0x4, offset = 0x4, fixed_abs, tag = 'smem constant byte address 0x4 - core index']
  #allocation1 [shape = 'u32[144,128]{1,0:T(1,128)}', space=vmem, size = 0x12000, scoped, tag = 'internal scratch']
  %s0 = inlined_call_operand.vmem [shape: f32[8,32], index: 0, kind: input, shape index: {}]
  %s1 = inlined_call_operand.vmem [shape: f32[32,128], index: 1, kind: input, shape index: {}]
  %s2 = inlined_call_operand.vmem [shape: f32[1,128], index: 2, kind: input, shape index: {}]
  %s3 = inlined_call_operand.vmem [shape: s32[8,1], index: 3, kind: input, shape index: {}]
  %s4 = inlined_call_operand.hbm [shape: f32[8,128], index: 4, kind: output, shape index: {0}]
  %s5 = inlined_call_operand.hbm [shape: f32[1,1], index: 5, kind: output, shape index: {1}]
  %6 = xla_tuple %s4, %s5
  %s7 = sld [smem:[#allocation0]]
  $region34: #{ffnn_forward.1} parent=0
    _
  %s9 = ssub.s32 1, %s7
  %s10 = scalar_select 0, %s9, %s7
  $region1: #{ffnn_forward.1} parent=0
    #allocation2 [shape = 'u8[4096]{0}', space=vmem, size = 0x1000, scoped, tag = 'output window, operand 0, single buffered']
    #allocation3 [shape = 's32[1]{0}', space=sflag, size = 0x4, scoped, tag = 'scoped memory for ffnn_forward.1']
    #allocation4 [shape = 's32[1]{0}', space=sflag, size = 0x4, scoped, tag = 'scoped memory for ffnn_forward.1']
    #allocation5 [shape = 'u8[512]{0}', space=smem, size = 0x200, scoped, tag = 'output window, operand 1, single buffered']
    %11 = vsyncpa [#allocation3], 0
    %12 = vsyncpa [#allocation4], 0
    // Predicated region
    $region2: #{ffnn_forward.1} parent=1 // pred_check
      _
    $region3: #{ffnn_forward.1} parent=1 // pred_check_branch
      %14 = sbr.rel (0) target = $region5
    $region4: #{ffnn_forward.1} parent=1 // pred_region
      _
    $region5: #{ffnn_forward.1} parent=1 // pred_fallthru
      _
    // Predicated region
    $region6: #{ffnn_forward.1} parent=1 // pred_check
      _
    $region7: #{ffnn_forward.1} parent=1 // pred_check_branch
      %16 = sbr.rel (0) target = $region9
    $region8: #{ffnn_forward.1} parent=1 // pred_region
      _
    $region9: #{ffnn_forward.1} parent=1 // pred_fallthru
      _
    // Predicated region
    $region10: #{ffnn_forward.1} parent=1 // pred_check
      _
    $region11: #{ffnn_forward.1} parent=1 // pred_check_branch
      %18 = sbr.rel (0) target = $region13
    $region12: #{ffnn_forward.1} parent=1 // pred_region
      _
    $region13: #{ffnn_forward.1} parent=1 // pred_fallthru
      _
    // Predicated region
    $region14: #{ffnn_forward.1} parent=1 // pred_check
      _
    $region15: #{ffnn_forward.1} parent=1 // pred_check_branch
      %20 = sbr.rel (0) target = $region17
    $region16: #{ffnn_forward.1} parent=1 // pred_region
      _
    $region17: #{ffnn_forward.1} parent=1 // pred_fallthru
      _
    %v21 = vld [vmem:[%s0] sm:$0xff]
    %v22 = vld [vmem:[%s1] sm:$0xff]
    %v23 = vld [vmem:[%s1 + $0x8] sm:$0xff]
    %v24 = vld [vmem:[%s1 + $0x10] sm:$0xff]
    %v25 = vld [vmem:[%s1 + $0x18] sm:$0xff]
    %v26 = vld [vmem:[%s2] sm:$0x1]
    %v28 = vlaneseq
    %v29 = vshrl.u32 %v28, 7
    %v30 = vsub.s32 0, %v29
    %v31 = vrot.slane %v26, %v30
    %vm33 = vcmask 261120
    %v35 = vsel %vm33, %v21, 0
    %37 = vmatprep.subr.mxu0 0.0
    %38 = vmatpush1.msra.mxu0 %v22
    %39 = vmatprep.subr.mxu0 0.0
    %40 = vmatpush1.msra.mxu0 %v23
    %41 = vmatprep.subr.mxu0 0.0
    %42 = vmatpush1.msra.mxu0 %v24
    %43 = vmatprep.subr.mxu0 0.0
    %44 = vmatpush1.msra.mxu0 %v25
    %45 = vmatprep.subr.mxu0 0.0
    %46 = vmatpush1.msra.mxu0 0.0
    %47 = vmatprep.subr.mxu0 0.0
    %48 = vmatpush1.msra.mxu0 0.0
    %49 = vmatprep.subr.mxu0 0.0
    %50 = vmatpush1.msra.mxu0 0.0
    %51 = vmatprep.subr.mxu0 0.0
    %52 = vmatpush1.msra.mxu0 0.0
    %53 = vmatprep.subr.mxu0 0.0
    %54 = vmatpush1.msra.mxu0 0.0
    %55 = vmatprep.subr.mxu0 0.0
    %56 = vmatpush1.msra.mxu0 0.0
    %57 = vmatprep.subr.mxu0 0.0
    %58 = vmatpush1.msra.mxu0 0.0
    %59 = vmatprep.subr.mxu0 0.0
    %60 = vmatpush1.msra.mxu0 0.0
    %61 = vmatprep.subr.mxu0 0.0
    %62 = vmatpush1.msra.mxu0 0.0
    %63 = vmatprep.subr.mxu0 0.0
    %64 = vmatpush1.msra.mxu0 0.0
    %65 = vmatprep.subr.mxu0 0.0
    %66 = vmatpush1.msra.mxu0 0.0
    %67 = vmatprep.subr.mxu0 0.0
    %68 = vmatpush1.msra.mxu0 0.0
    %69 = vmatprep.subr.mxu0 0.0
    %70 = vmatpush1.msra.mxu0 0.0
    %71 = vmatprep.subr.mxu0 0.0
    %72 = vmatpush1.msra.mxu0 0.0
    %73 = vmatprep.subr.mxu0 0.0
    %74 = vmatpush1.msra.mxu0 0.0
    %75 = vmatprep.subr.mxu0 0.0
    %76 = vmatpush1.msra.mxu0 0.0
    %77 = vmatprep.subr.mxu0 0.0
    %78 = vmatpush1.msra.mxu0 0.0
    %79 = vmatprep.subr.mxu0 0.0
    %80 = vmatpush1.msra.mxu0 0.0
    %81 = vmatprep.subr.mxu0 0.0
    %82 = vmatpush1.msra.mxu0 0.0
    %83 = vmatprep.subr.mxu0 0.0
    %84 = vmatpush1.msra.mxu0 0.0
    %85 = vmatprep.subr.mxu0 0.0
    %86 = vmatpush1.msra.mxu0 0.0
    %87 = vmatprep.subr.mxu0 0.0
    %88 = vmatpush1.msra.mxu0 0.0
    %89 = vmatprep.subr.mxu0 0.0
    %90 = vmatpush1.msra.mxu0 0.0
    %91 = vmatprep.subr.mxu0 0.0
    %92 = vmatpush1.msra.mxu0 0.0
    %93 = vmatprep.subr.mxu0 0.0
    %94 = vmatpush1.msra.mxu0 0.0
    %95 = vmatprep.subr.mxu0 0.0
    %96 = vmatpush1.msra.mxu0 0.0
    %97 = vmatprep.subr.mxu0 0.0
    %98 = vmatpush1.msra.mxu0 0.0
    %99 = vmatprep.subr.mxu0 0.0
    %100 = vmatpush1.msra.mxu0 0.0
    %101 = vmatprep.mubr.f32.mxu0 0.0
    %102 = vmatmul.mubr.f32.gmra.mrb[0].mxu0 %v35
    %v103 = vpop.f32.mrb[0].mxu0
    %v104 = vadd.f32 %v31, %v103
    %v105 = vpop.f32.mrb[0].mxu0
    %106 = vdwg.mxu0
    %107 = vst [vmem:[#allocation2] sm:$0xff] %v104
    %v108 = vld [vmem:[%s3] sm:$0xff]
    %v109 = vlaneseq
    %v110 = vand.u32 %v109, 127
    %vm111 = vcmp.lt.s32.totalorder %v110, 8
    %v112 = vsel %vm111, %v104, -inf
    %113 = vmax.xlane.f32.xlu0 %v112
    %v114 = vpop.xlane.xlu0 %113
    %v115 = vsub.f32 %v112, %v114
    %v116 = vmul.f32 %v115, 1.442695
    %v117 = vpow.pop %v116
    %118 = vadd.xlane.f32.xlu0 %v117
    %v119 = vpop.xlane.xlu0 %118
    %v120 = vlog2.pop %v119
    %v121 = vmul.f32 %v120, 0.6931472
    %v122 = vadd.f32 %v121, %v114
    %123 = vset.pattern.permute.xlu0 0
    %124 = vperm.xlu0 %123, %v108
    %v125 = vpop.permute.xlu0 %124
    %vm126 = vcmp.eq.s32.totalorder %v110, %v125
    %v127 = vsel %vm126, %v104, 0.0
    %128 = vadd.xlane.f32.xlu0 %v127
    %v129 = vpop.xlane.xlu0 %128
    %v130 = vsub.f32 %v122, %v129
    %vm131 = vcmask 7168
    %v132 = vsel %vm131, %v130, 0.0
    %133 = vadd.xlane.f32.xlu0 %v132
    %v134 = vpop.xlane.xlu0 %133
    %v135 = vrot.slane %v134, 4
    %v136 = vadd.f32 %v134, %v135
    %v137 = vrot.slane %v136, 2
    %v138 = vadd.f32 %v136, %v137
    %v139 = vrot.slane %v138, 1
    %v140 = vadd.f32 %v138, %v139
    %s141 = vtos %v140
    %s142 = scalar_lea.smem [#allocation5], 0
    %143 = sst [smem:[%s142]] %s141
    // Predicated region
    $region18: #{ffnn_forward.1} parent=1 // pred_check
      _
    $region19: #{ffnn_forward.1} parent=1 // pred_check_branch
      %145 = sbr.rel (0) target = $region21
    $region20: #{ffnn_forward.1} parent=1 // pred_region
      %s147 = ssub.s32 128, 128
      %148 = vsyncadd [#allocation3], %s147
      %s150 = sshll.u32 [#allocation2], 4
      %s151 = int_to_ptr.vmem [resolvable:$true] %s150
      %153 = dma.vmem_to_hbm [thread:$0]  %s151, 128, %s4, [#allocation3]
    $region21: #{ffnn_forward.1} parent=1 // pred_fallthru
      _
    // Predicated region
    $region22: #{ffnn_forward.1} parent=1 // pred_check
      _
    $region23: #{ffnn_forward.1} parent=1 // pred_check_branch
      %155 = sbr.rel (0) target = $region25
    $region24: #{ffnn_forward.1} parent=1 // pred_region
      %s157 = ssub.s32 16, 16
      %158 = vsyncadd [#allocation4], %s157
      %161 = dma.smem_to_hbm [#allocation5], 16, %s5, [#allocation4]
    $region25: #{ffnn_forward.1} parent=1 // pred_fallthru
      _
    // Predicated region
    $region26: #{ffnn_forward.1} parent=1 // pred_check
      _
    $region27: #{ffnn_forward.1} parent=1 // pred_check_branch
      %163 = sbr.rel (0) target = $region29
    $region28: #{ffnn_forward.1} parent=1 // pred_region
      %164 = dma.done [#allocation3], 128
    $region29: #{ffnn_forward.1} parent=1 // pred_fallthru
      _
    // Predicated region
    $region30: #{ffnn_forward.1} parent=1 // pred_check
      _
    $region31: #{ffnn_forward.1} parent=1 // pred_check_branch
      %166 = sbr.rel (0) target = $region33
    $region32: #{ffnn_forward.1} parent=1 // pred_region
      %167 = dma.done [#allocation4], 16
    $region33: #{ffnn_forward.1} parent=1 // pred_fallthru
      _
    %168 = sfence
    %169 = vsyncpa [#allocation3], 1
    %170 = vsyncpa [#allocation4], 1

</llo_original>
